<compile_context>
chip_gen: v7x
topology: tpu7x:2x2x1
jax: 0.10.0
libtpu: 0.0.40
codegen_flags: <defaults>
</compile_context>

<pallas_src>
import jax
import jax.numpy as jnp
from jax.experimental import pallas as pl
from jax.experimental.pallas import tpu as pltpu

_LANE = 128
_SMOOTH = 1e-5


def _round_up(x, m):
    return ((x + m - 1) // m) * m


def _make_kernel(C, S, n_kps, HW, has_mask, has_wts, needs_valid, ragged):
    """DSC-loss kernel specialised on which optional streams / masks exist."""

    def kernel(*refs):
        idx = 0
        pred_ref = refs[idx]; idx += 1           # (1, C, S, 128) logits, native dtype
        label_ref = refs[idx]; idx += 1          # (1, S, 128)    int class ids
        mask_ref = wts_ref = None
        if has_mask:
            mask_ref = refs[idx]; idx += 1       # (1, S, 128)
        if has_wts:
            wts_ref = refs[idx]; idx += 1        # (1, S, 128)
        out_ref = refs[idx]; idx += 1            # (1, 1, C, 128) packed results
        inter_acc = refs[idx]; idx += 1          # (C, 128)
        union_acc = refs[idx]; idx += 1          # (C, 128)
        ce_acc = refs[idx]; idx += 1             # (1, 128)
        msum_acc = refs[idx]; idx += 1           # (1, 128)
        mw_acc = refs[idx] if has_wts else None  # (1, 128)

        k = pl.program_id(2)

        @pl.when(k == 0)
        def _init():
            inter_acc[...] = jnp.zeros_like(inter_acc)
            union_acc[...] = jnp.zeros_like(union_acc)
            ce_acc[...] = jnp.zeros_like(ce_acc)
            msum_acc[...] = jnp.zeros_like(msum_acc)
            if has_wts:
                mw_acc[...] = jnp.zeros_like(mw_acc)

        # Streams are cast in-kernel; HBM path keeps the native (narrow) dtype.
        pred = pred_ref[0].astype(jnp.float32)          # (C, S, 128)
        label = label_ref[...].astype(jnp.int32)        # (1, S, 128)

        valid = None
        if needs_valid:
            kk = pl.program_id(1) * n_kps + k           # global spatial block
            row = jax.lax.broadcasted_iota(jnp.int32, (1, S, _LANE), 1)
            lane = jax.lax.broadcasted_iota(jnp.int32, (1, S, _LANE), 2)
            valid = (kk * S + row) * _LANE + lane < HW  # (1, S, 128) bool

        if ragged:
            # Pallas pads out-of-range rows of the last block with unspecified
            # values (possibly NaN/Inf) -> sanitize before exp / products.
            pred = jnp.where(valid, pred, 0.0)

        if has_mask:
            mask = mask_ref[...].astype(jnp.float32)
            if needs_valid:
                mask = jnp.where(valid, mask, 0.0)
        elif needs_valid:
            mask = valid.astype(jnp.float32)
        else:
            mask = None                                  # all-ones, never built

        if has_wts:
            wts = wts_ref[...].astype(jnp.float32)
            if ragged:
                wts = jnp.where(valid, wts, 0.0)
            mw = wts if mask is None else mask * wts     # mask*weights, once
        else:
            mw = mask                                    # may be None (== ones)

        # One-hot target along the class (slab) axis.
        class_ids = jax.lax.broadcasted_iota(jnp.int32, (C, S, _LANE), 0)
        onehot = (class_ids == label).astype(jnp.float32)        # (C, S, 128)

        # Numerically stable softmax / log-softmax over class slabs (VPU ops).
        m = jnp.max(pred, axis=0, keepdims=True)                 # (1, S, 128)
        ex = jnp.exp(pred - m)
        denom = jnp.sum(ex, axis=0, keepdims=True)
        sm = ex * pl.reciprocal(denom, approx=True)              # EUP (~2^-12 rel)
        lse = m + jnp.log(denom)
        picked = jnp.sum(onehot * pred, axis=0, keepdims=True)
        ce = lse - picked                                        # (1, S, 128)

        # --- cross-entropy partials (sublane-axis reduce only; lane reduce at end)
        ce_w = ce if mw is None else ce * mw
        ce_acc[...] += jnp.sum(ce_w, axis=1)                     # (1, 128)

        if mask is None:
            msum_acc[...] += float(S)                            # S rows/lane
        else:
            msum_acc[...] += jnp.sum(mask, axis=1)

        if has_wts:
            mw_acc[...] += jnp.sum(mw, axis=1)

        # --- dice partials, fused (no sm*mask / onehot*mask temporaries)
        son = sm * onehot
        inter_c = son if mw is None else son * mw
        union_c = (sm + onehot) if mask is None else (sm + onehot) * mask
        inter_acc[...] += jnp.sum(inter_c, axis=1)               # (C, 128)
        union_acc[...] += jnp.sum(union_c, axis=1)

        # --- finalize: lane-reduce accumulators, one lane-dense packed store
        @pl.when(k == pl.num_programs(2) - 1)
        def _fin():
            lane = jax.lax.broadcasted_iota(jnp.int32, (C, _LANE), 1)
            inter_s = jnp.sum(inter_acc[...], axis=1, keepdims=True)   # (C, 1)
            union_s = jnp.sum(union_acc[...], axis=1, keepdims=True)   # (C, 1)
            ce_s = jnp.sum(ce_acc[...], keepdims=True)                 # (1, 1)
            ms_s = jnp.sum(msum_acc[...], keepdims=True)               # (1, 1)
            mw_s = jnp.sum(mw_acc[...], keepdims=True) if has_wts else ms_s
            packed = jnp.where(lane == 0, inter_s, 0.0)
            packed = packed + jnp.where(lane == 1, union_s, 0.0)
            packed = packed + jnp.where(lane == 2, ce_s, 0.0)
            packed = packed + jnp.where(lane == 3, ms_s, 0.0)
            packed = packed + jnp.where(lane == 4, mw_s, 0.0)
            out_ref[0, 0] = packed

    return kernel


def dsc_loss_h(pred, label, pixel_mask=None, pixel_weights=None, *,
               intra_weights=None, inter_weight=1.0,
               tile_bytes=4 * 1024 * 1024):
    """JAX/Pallas equivalent of DSCLossH.forward (2D, is_3d=False)."""
    B, C, H, W = pred.shape
    HW = H * W
    HW128 = _round_up(HW, _LANE)
    pad = HW128 - HW
    R = HW128 // _LANE

    has_mask = pixel_mask is not None
    has_wts = pixel_weights is not None

    if not jnp.issubdtype(label.dtype, jnp.integer):
        label = label.astype(jnp.int32)

    # Flatten spatial and reshape to (rows, 128) so the (8,128) vreg is filled
    # even for small C.  These reshapes are copy-free when HW % 128 == 0.
    def _prep(x, lead):
        x = x.reshape(lead + (HW,))
        if pad:
            # TODO(synk): odd HW needs a one-off pad copy; the common
            # HW % 128 == 0 case pays nothing.
            x = jnp.pad(x, [(0, 0)] * len(lead) + [(0, pad)])
        return x.reshape(lead + (R, _LANE))

    pred4 = _prep(pred, (B, C))                 # native dtype on the DMA path
    label4 = _prep(label, (B,))                 # native int dtype
    inputs = [pred4, label4]
    if has_mask:
        inputs.append(_prep(pixel_mask, (B,)))  # native dtype (bool/int8/f32 ok)
    if has_wts:
        inputs.append(_prep(pixel_weights, (B,)))

    # --- spatial tile rows S: as many as fit the per-buffer VMEM budget.
    bytes_px = C * pred.dtype.itemsize + label4.dtype.itemsize
    if has_mask:
        bytes_px += inputs[2].dtype.itemsize
    if has_wts:
        bytes_px += inputs[-1].dtype.itemsize
    max_rows = max(8, (tile_bytes // (_LANE * bytes_px)) // 8 * 8)

    ragged = False
    if R <= max_rows:
        S, n_k = R, 1
    else:
        S = 0
        for cand in range(max_rows, 7, -8):     # largest mult-of-8 divisor of R
            if R % cand == 0:
                S = cand
                break
        if S >= max(64, max_rows // 4):
            n_k = R // S
        else:                                   # no decent divisor: ragged tail
            S, ragged = max_rows, True
            n_k = (R + S - 1) // S

    needs_valid = ragged or (pad > 0 and not has_mask)

    # v7x has 2 TensorCores: when B == 1 split the spatial range so both work.
    n_split = 2 if (B == 1 and n_k >= 2 and n_k % 2 == 0) else 1
    n_kps = n_k // n_split

    kernel = _make_kernel(C, S, n_kps, HW, has_mask, has_wts, needs_valid, ragged)

    pred_spec = pl.BlockSpec((1, C, S, _LANE),
                             lambda b, s, k: (b, 0, s * n_kps + k, 0))
    row_spec = pl.BlockSpec((1, S, _LANE),
                            lambda b, s, k: (b, s * n_kps + k, 0))
    in_specs = [pred_spec, row_spec]
    if has_mask:
        in_specs.append(row_spec)
    if has_wts:
        in_specs.append(row_spec)

    scratch = [pltpu.VMEM((C, _LANE), jnp.float32),   # intersection
               pltpu.VMEM((C, _LANE), jnp.float32),   # union
               pltpu.VMEM((1, _LANE), jnp.float32),   # sum(ce*mask*wts)
               pltpu.VMEM((1, _LANE), jnp.float32)]   # sum(mask)
    if has_wts:
        scratch.append(pltpu.VMEM((1, _LANE), jnp.float32))  # sum(mask*wts)

    packed = pl.pallas_call(
        kernel,
        out_shape=jax.ShapeDtypeStruct((B, n_split, C, _LANE), jnp.float32),
        grid=(B, n_split, n_kps),
        in_specs=in_specs,
        out_specs=pl.BlockSpec((1, 1, C, _LANE), lambda b, s, k: (b, s, 0, 0)),
        scratch_shapes=scratch,
        compiler_params=pltpu.CompilerParams(
            dimension_semantics=("parallel", "parallel", "arbitrary"),
            vmem_limit_bytes=32 * 1024 * 1024),
    )(*inputs)

    # --- tiny host glue: combine per-(batch, split) partials into the loss.
    inter = jnp.sum(packed[..., 0], axis=1)        # (B, C)
    union = jnp.sum(packed[..., 1], axis=1)        # (B, C)
    ce_sum = jnp.sum(packed[:, :, 0, 2], axis=1)   # (B,)
    msum = jnp.sum(packed[:, :, 0, 3], axis=1)     # (B,)
    mwsum = jnp.sum(packed[:, :, 0, 4], axis=1)    # (B,)

    if intra_weights is None:
        intra_weights = jnp.ones((C,), jnp.float32)
    else:
        intra_weights = jnp.asarray(intra_weights, jnp.float32)

    cel = jnp.sum(ce_sum) / (jnp.sum(msum) + _SMOOTH)
    dice = 2.0 * inter / (union + _SMOOTH)                     # (B, C)
    one = (mwsum / (msum + _SMOOTH))[:, None]                  # (B, 1)
    dice_per_class = jnp.sum(one - dice, axis=0) / B           # (C,)
    dicel = jnp.mean(dice_per_class * intra_weights)
    return cel * (1.0 - inter_weight) + dicel * inter_weight


def _reference(pred, label, pixel_mask, pixel_weights, intra_weights, inter_weight):
    """Pure-JAX mirror of DSCLossH.forward for correctness checking."""
    B, C, H, W = pred.shape
    if pixel_mask is None:
        pixel_mask = jnp.ones((B, H, W), jnp.float32)
    if pixel_weights is None:
        pixel_weights = jnp.ones((B, H, W), jnp.float32)
    logits = pred.astype(jnp.float32)
    logp = jax.nn.log_softmax(logits, axis=1)
    onehot = jax.nn.one_hot(label, C, axis=1, dtype=jnp.float32)     # (B,C,H,W)
    ce = -jnp.sum(onehot * logp, axis=1)                             # (B,H,W)
    cel = jnp.sum(ce * pixel_mask * pixel_weights) / (jnp.sum(pixel_mask) + _SMOOTH)
    sm = jax.nn.softmax(logits, axis=1)
    pm = pixel_mask[:, None]
    pw = pixel_weights[:, None]
    inter = jnp.sum(sm * onehot * pm * pw, axis=(2, 3))
    union = jnp.sum(sm * pm + onehot * pm, axis=(2, 3))
    dice = 2.0 * inter / (union + _SMOOTH)
    one = jnp.sum(pm * pw, axis=(2, 3)) / (jnp.sum(pm, axis=(2, 3)) + _SMOOTH)
    dl = jnp.sum(one - dice, axis=0) / B
    dicel = jnp.mean(dl * intra_weights)
    return cel * (1.0 - inter_weight) + dicel * inter_weight


if __name__ == "__main__":
    key = jax.random.PRNGKey(0)
    B, C, H, W = 2, 4, 16, 16
    k1, k2, k3, k4 = jax.random.split(key, 4)

    pred = jax.random.normal(k1, (B, C, H, W), jnp.float32)
    label = jax.random.randint(k2, (B, H, W), 0, C, jnp.int32)

    intra_weights = jnp.ones((C,), jnp.float32)
    inter_weight = 0.5

    # Default path: pixel_mask / pixel_weights are None (no ones streams DMA'd).
    loss = dsc_loss_h(pred, label,
                      intra_weights=intra_weights, inter_weight=inter_weight)
    loss = jax.block_until_ready(loss)

    # Masked / weighted path (separate specialisation of the kernel).
    pixel_mask = (jax.random.uniform(k3, (B, H, W)) > 0.2).astype(jnp.float32)
    pixel_weights = 0.5 + jax.random.uniform(k4, (B, H, W), jnp.float32)
    loss_mw = dsc_loss_h(pred, label, pixel_mask, pixel_weights,
                         intra_weights=intra_weights, inter_weight=inter_weight)
    loss_mw = jax.block_until_ready(loss_mw)

    # Loose-tolerance check vs pure-JAX reference (approx reciprocal ~2^-12 rel).
    ref = _reference(pred, label, None, None, intra_weights, inter_weight)
    ref_mw = _reference(pred, label, pixel_mask, pixel_weights,
                        intra_weights, inter_weight)
    assert abs(float(loss) - float(ref)) < 5e-3 * (1.0 + abs(float(ref)))
    assert abs(float(loss_mw) - float(ref_mw)) < 5e-3 * (1.0 + abs(float(ref_mw)))

    print("KERNEL_OK")
</pallas_src>

<mosaic_0001>
module attributes {stable_mosaic.version = 11 : i64} {
  func.func @kernel(%arg0: i32, %arg1: i32, %arg2: i32, %arg3: memref<1x4x2x128xf32, #tpu.memory_space<vmem>>, %arg4: memref<1x2x128xi32, #tpu.memory_space<vmem>>, %arg5: memref<1x1x4x128xf32, #tpu.memory_space<vmem>>, %arg6: memref<4x128xf32, #tpu.memory_space<vmem>>, %arg7: memref<4x128xf32, #tpu.memory_space<vmem>>, %arg8: memref<1x128xf32, #tpu.memory_space<vmem>>, %arg9: memref<1x128xf32, #tpu.memory_space<vmem>>) attributes {dimension_semantics = [#tpu.dimension_semantics<parallel>, #tpu.dimension_semantics<parallel>, #tpu.dimension_semantics<arbitrary>], iteration_bounds = array<i64: 2, 1, 1>, scalar_prefetch = 0 : i64, scratch_operands = 4 : i64, tpu.core_type = #tpu.core_type<tc>, window_params = [{transform_indices = @transform_0, window_bounds = array<i64: 1, 4, 2, 128>}, {transform_indices = @transform_1, window_bounds = array<i64: 1, 2, 128>}, {transform_indices = @transform_2, window_bounds = array<i64: 1, 1, 4, 128>}]} {
    %c0_i32 = arith.constant 0 : i32
    %0 = arith.cmpi eq, %arg2, %c0_i32 : i32
    %1 = arith.extui %0 : i1 to i32
    %c0_i32_0 = arith.constant 0 : i32
    %2 = arith.cmpi ne, %1, %c0_i32_0 : i32
    scf.if %2 {
      %cst_31 = arith.constant 0.000000e+00 : f32
      %48 = vector.broadcast %cst_31 : f32 to vector<4x128xf32>
      %c0_32 = arith.constant 0 : index
      %c0_33 = arith.constant 0 : index
      %49 = vector.load %arg6[%c0_32, %c0_33] : memref<4x128xf32, #tpu.memory_space<vmem>>, vector<4x128xf32>
      tpu.vector_store %arg6[%c0_32, %c0_33], %48 {strides = array<i32>} : memref<4x128xf32, #tpu.memory_space<vmem>>, vector<4x128xf32>,
      %cst_34 = arith.constant 0.000000e+00 : f32
      %50 = vector.broadcast %cst_34 : f32 to vector<4x128xf32>
      %c0_35 = arith.constant 0 : index
      %c0_36 = arith.constant 0 : index
      %51 = vector.load %arg7[%c0_35, %c0_36] : memref<4x128xf32, #tpu.memory_space<vmem>>, vector<4x128xf32>
      tpu.vector_store %arg7[%c0_35, %c0_36], %50 {strides = array<i32>} : memref<4x128xf32, #tpu.memory_space<vmem>>, vector<4x128xf32>,
      %cst_37 = arith.constant 0.000000e+00 : f32
      %52 = vector.broadcast %cst_37 : f32 to vector<1x128xf32>
      %c0_38 = arith.constant 0 : index
      %c0_39 = arith.constant 0 : index
      %53 = vector.load %arg8[%c0_38, %c0_39] : memref<1x128xf32, #tpu.memory_space<vmem>>, vector<1x128xf32>
      tpu.vector_store %arg8[%c0_38, %c0_39], %52 {strides = array<i32>} : memref<1x128xf32, #tpu.memory_space<vmem>>, vector<1x128xf32>,
      %cst_40 = arith.constant 0.000000e+00 : f32
      %54 = vector.broadcast %cst_40 : f32 to vector<1x128xf32>
      %c0_41 = arith.constant 0 : index
      %c0_42 = arith.constant 0 : index
      %55 = vector.load %arg9[%c0_41, %c0_42] : memref<1x128xf32, #tpu.memory_space<vmem>>, vector<1x128xf32>
      tpu.vector_store %arg9[%c0_41, %c0_42], %54 {strides = array<i32>} : memref<1x128xf32, #tpu.memory_space<vmem>>, vector<1x128xf32>,
    } else {
    }
    %c0 = arith.constant 0 : index
    %c0_1 = arith.constant 0 : index
    %c0_2 = arith.constant 0 : index
    %c0_3 = arith.constant 0 : index
    %3 = vector.load %arg3[%c0, %c0_1, %c0_2, %c0_3] : memref<1x4x2x128xf32, #tpu.memory_space<vmem>>, vector<1x4x2x128xf32>
    %4 = vector.shape_cast %3 : vector<1x4x2x128xf32> to vector<4x2x128xf32>
    %c0_4 = arith.constant 0 : index
    %c0_5 = arith.constant 0 : index
    %c0_6 = arith.constant 0 : index
    %5 = vector.load %arg4[%c0_4, %c0_5, %c0_6] : memref<1x2x128xi32, #tpu.memory_space<vmem>>, vector<1x2x128xi32>
    %6 = tpu.iota {dimensions = array<i32: 0>} : vector<4x2x128xi32>
    %7 = vector.broadcast %5 : vector<1x2x128xi32> to vector<4x2x128xi32>
    %8 = arith.cmpi eq, %6, %7 : vector<4x2x128xi32>
    %9 = arith.extui %8 : vector<4x2x128xi1> to vector<4x2x128xi32>
    %10 = arith.sitofp %9 : vector<4x2x128xi32> to vector<4x2x128xf32>
    %cst = arith.constant dense<0xFF800000> : vector<2x128xf32>
    %11 = vector.multi_reduction <maximumf>, %4, %cst [0] : vector<4x2x128xf32> to vector<2x128xf32>
    %12 = vector.shape_cast %11 : vector<2x128xf32> to vector<1x2x128xf32>
    %13 = vector.broadcast %12 : vector<1x2x128xf32> to vector<4x2x128xf32>
    %14 = arith.subf %4, %13 : vector<4x2x128xf32>
    %15 = math.exp %14 : vector<4x2x128xf32>
    %cst_7 = arith.constant dense<0.000000e+00> : vector<2x128xf32>
    %16 = vector.multi_reduction <add>, %15, %cst_7 [0] : vector<4x2x128xf32> to vector<2x128xf32>
    %17 = vector.shape_cast %16 : vector<2x128xf32> to vector<1x2x128xf32>
    %18 = tpu.reciprocal %17 {approx = true} : vector<1x2x128xf32> -> vector<1x2x128xf32>
    %19 = vector.broadcast %18 : vector<1x2x128xf32> to vector<4x2x128xf32>
    %20 = arith.mulf %15, %19 : vector<4x2x128xf32>
    %21 = math.log %17 : vector<1x2x128xf32>
    %22 = arith.addf %12, %21 : vector<1x2x128xf32>
    %23 = arith.mulf %10, %4 : vector<4x2x128xf32>
    %cst_8 = arith.constant dense<0.000000e+00> : vector<2x128xf32>
    %24 = vector.multi_reduction <add>, %23, %cst_8 [0] : vector<4x2x128xf32> to vector<2x128xf32>
    %25 = vector.shape_cast %24 : vector<2x128xf32> to vector<1x2x128xf32>
    %26 = arith.subf %22, %25 : vector<1x2x128xf32>
    %c0_9 = arith.constant 0 : index
    %c0_10 = arith.constant 0 : index
    %27 = vector.load %arg8[%c0_9, %c0_10] : memref<1x128xf32, #tpu.memory_space<vmem>>, vector<1x128xf32>
    %cst_11 = arith.constant dense<0.000000e+00> : vector<1x128xf32>
    %28 = vector.multi_reduction <add>, %26, %cst_11 [1] : vector<1x2x128xf32> to vector<1x128xf32>
    %29 = arith.addf %27, %28 : vector<1x128xf32>
    %c0_12 = arith.constant 0 : index
    %c0_13 = arith.constant 0 : index
    %30 = vector.load %arg8[%c0_12, %c0_13] : memref<1x128xf32, #tpu.memory_space<vmem>>, vector<1x128xf32>
    tpu.vector_store %arg8[%c0_12, %c0_13], %29 {strides = array<i32>} : memref<1x128xf32, #tpu.memory_space<vmem>>, vector<1x128xf32>,
    %c0_14 = arith.constant 0 : index
    %c0_15 = arith.constant 0 : index
    %31 = vector.load %arg9[%c0_14, %c0_15] : memref<1x128xf32, #tpu.memory_space<vmem>>, vector<1x128xf32>
    %cst_16 = arith.constant 2.000000e+00 : f32
    %32 = vector.broadcast %cst_16 : f32 to vector<1x128xf32>
    %33 = arith.addf %31, %32 : vector<1x128xf32>
    %c0_17 = arith.constant 0 : index
    %c0_18 = arith.constant 0 : index
    %34 = vector.load %arg9[%c0_17, %c0_18] : memref<1x128xf32, #tpu.memory_space<vmem>>, vector<1x128xf32>
    tpu.vector_store %arg9[%c0_17, %c0_18], %33 {strides = array<i32>} : memref<1x128xf32, #tpu.memory_space<vmem>>, vector<1x128xf32>,
    %35 = arith.mulf %20, %10 : vector<4x2x128xf32>
    %36 = arith.addf %20, %10 : vector<4x2x128xf32>
    %c0_19 = arith.constant 0 : index
    %c0_20 = arith.constant 0 : index
    %37 = vector.load %arg6[%c0_19, %c0_20] : memref<4x128xf32, #tpu.memory_space<vmem>>, vector<4x128xf32>
    %cst_21 = arith.constant dense<0.000000e+00> : vector<4x128xf32>
    %38 = vector.multi_reduction <add>, %35, %cst_21 [1] : vector<4x2x128xf32> to vector<4x128xf32>
    %39 = arith.addf %37, %38 : vector<4x128xf32>
    %c0_22 = arith.constant 0 : index
    %c0_23 = arith.constant 0 : index
    %40 = vector.load %arg6[%c0_22, %c0_23] : memref<4x128xf32, #tpu.memory_space<vmem>>, vector<4x128xf32>
    tpu.vector_store %arg6[%c0_22, %c0_23], %39 {strides = array<i32>} : memref<4x128xf32, #tpu.memory_space<vmem>>, vector<4x128xf32>,
    %c0_24 = arith.constant 0 : index
    %c0_25 = arith.constant 0 : index
    %41 = vector.load %arg7[%c0_24, %c0_25] : memref<4x128xf32, #tpu.memory_space<vmem>>, vector<4x128xf32>
    %cst_26 = arith.constant dense<0.000000e+00> : vector<4x128xf32>
    %42 = vector.multi_reduction <add>, %36, %cst_26 [1] : vector<4x2x128xf32> to vector<4x128xf32>
    %43 = arith.addf %41, %42 : vector<4x128xf32>
    %c0_27 = arith.constant 0 : index
    %c0_28 = arith.constant 0 : index
    %44 = vector.load %arg7[%c0_27, %c0_28] : memref<4x128xf32, #tpu.memory_space<vmem>>, vector<4x128xf32>
    tpu.vector_store %arg7[%c0_27, %c0_28], %43 {strides = array<i32>} : memref<4x128xf32, #tpu.memory_space<vmem>>, vector<4x128xf32>,
    %c0_i32_29 = arith.constant 0 : i32
    %45 = arith.cmpi eq, %arg2, %c0_i32_29 : i32
    %46 = arith.extui %45 : i1 to i32
    %c0_i32_30 = arith.constant 0 : i32
    %47 = arith.cmpi ne, %46, %c0_i32_30 : i32
    scf.if %47 {
      %48 = tpu.iota {dimensions = array<i32: 1>} : vector<4x128xi32>
      %c0_31 = arith.constant 0 : index
      %c0_32 = arith.constant 0 : index
      %49 = vector.load %arg6[%c0_31, %c0_32] : memref<4x128xf32, #tpu.memory_space<vmem>>, vector<4x128xf32>
      %cst_33 = arith.constant dense<0.000000e+00> : vector<4xf32>
      %50 = vector.multi_reduction <add>, %49, %cst_33 [1] : vector<4x128xf32> to vector<4xf32>
      %51 = vector.shape_cast %50 : vector<4xf32> to vector<4x1xf32>
      %c0_34 = arith.constant 0 : index
      %c0_35 = arith.constant 0 : index
      %52 = vector.load %arg7[%c0_34, %c0_35] : memref<4x128xf32, #tpu.memory_space<vmem>>, vector<4x128xf32>
      %cst_36 = arith.constant dense<0.000000e+00> : vector<4xf32>
      %53 = vector.multi_reduction <add>, %52, %cst_36 [1] : vector<4x128xf32> to vector<4xf32>
      %54 = vector.shape_cast %53 : vector<4xf32> to vector<4x1xf32>
      %c0_37 = arith.constant 0 : index
      %c0_38 = arith.constant 0 : index
      %55 = vector.load %arg8[%c0_37, %c0_38] : memref<1x128xf32, #tpu.memory_space<vmem>>, vector<1x128xf32>
      %56 = vector.shape_cast %55 : vector<1x128xf32> to vector<1x1x128xf32>
      %cst_39 = arith.constant dense<0.000000e+00> : vector<1xf32>
      %57 = vector.multi_reduction <add>, %56, %cst_39 [1, 2] : vector<1x1x128xf32> to vector<1xf32>
      %58 = vector.shape_cast %57 : vector<1xf32> to vector<1x1x1xf32>
      %59 = vector.extract %58[0, 0, 0] : f32 from vector<1x1x1xf32>
      %60 = vector.broadcast %59 : f32 to vector<1x1xf32>
      %c0_40 = arith.constant 0 : index
      %c0_41 = arith.constant 0 : index
      %61 = vector.load %arg9[%c0_40, %c0_41] : memref<1x128xf32, #tpu.memory_space<vmem>>, vector<1x128xf32>
      %62 = vector.shape_cast %61 : vector<1x128xf32> to vector<1x1x128xf32>
      %cst_42 = arith.constant dense<0.000000e+00> : vector<1xf32>
      %63 = vector.multi_reduction <add>, %62, %cst_42 [1, 2] : vector<1x1x128xf32> to vector<1xf32>
      %64 = vector.shape_cast %63 : vector<1xf32> to vector<1x1x1xf32>
      %65 = vector.extract %64[0, 0, 0] : f32 from vector<1x1x1xf32>
      %66 = vector.broadcast %65 : f32 to vector<1x1xf32>
      %c0_i32_43 = arith.constant 0 : i32
      %67 = vector.broadcast %c0_i32_43 : i32 to vector<4x128xi32>
      %68 = arith.cmpi eq, %48, %67 : vector<4x128xi32>
      %cst_44 = arith.constant 0.000000e+00 : f32
      %69 = vector.shape_cast %51 : vector<4x1xf32> to vector<4x1xf32>
      %70 = vector.broadcast %69 : vector<4x1xf32> to vector<4x128xf32>
      %71 = vector.broadcast %cst_44 : f32 to vector<4x128xf32>
      %72 = arith.select %68, %70, %71 : vector<4x128xi1>, vector<4x128xf32>
      %c1_i32 = arith.constant 1 : i32
      %73 = vector.broadcast %c1_i32 : i32 to vector<4x128xi32>
      %74 = arith.cmpi eq, %48, %73 : vector<4x128xi32>
      %cst_45 = arith.constant 0.000000e+00 : f32
      %75 = vector.shape_cast %54 : vector<4x1xf32> to vector<4x1xf32>
      %76 = vector.broadcast %75 : vector<4x1xf32> to vector<4x128xf32>
      %77 = vector.broadcast %cst_45 : f32 to vector<4x128xf32>
      %78 = arith.select %74, %76, %77 : vector<4x128xi1>, vector<4x128xf32>
      %79 = arith.addf %72, %78 : vector<4x128xf32>
      %c2_i32 = arith.constant 2 : i32
      %80 = vector.broadcast %c2_i32 : i32 to vector<4x128xi32>
      %81 = arith.cmpi eq, %48, %80 : vector<4x128xi32>
      %cst_46 = arith.constant 0.000000e+00 : f32
      %82 = vector.shape_cast %60 : vector<1x1xf32> to vector<1x1xf32>
      %83 = vector.broadcast %82 : vector<1x1xf32> to vector<4x128xf32>
      %84 = vector.broadcast %cst_46 : f32 to vector<4x128xf32>
      %85 = arith.select %81, %83, %84 : vector<4x128xi1>, vector<4x128xf32>
      %86 = arith.addf %79, %85 : vector<4x128xf32>
      %c3_i32 = arith.constant 3 : i32
      %87 = vector.broadcast %c3_i32 : i32 to vector<4x128xi32>
      %88 = arith.cmpi eq, %48, %87 : vector<4x128xi32>
      %cst_47 = arith.constant 0.000000e+00 : f32
      %89 = vector.shape_cast %66 : vector<1x1xf32> to vector<1x1xf32>
      %90 = vector.broadcast %89 : vector<1x1xf32> to vector<4x128xf32>
      %91 = vector.broadcast %cst_47 : f32 to vector<4x128xf32>
      %92 = arith.select %88, %90, %91 : vector<4x128xi1>, vector<4x128xf32>
      %93 = arith.addf %86, %92 : vector<4x128xf32>
      %c4_i32 = arith.constant 4 : i32
      %94 = vector.broadcast %c4_i32 : i32 to vector<4x128xi32>
      %95 = arith.cmpi eq, %48, %94 : vector<4x128xi32>
      %cst_48 = arith.constant 0.000000e+00 : f32
      %96 = vector.shape_cast %66 : vector<1x1xf32> to vector<1x1xf32>
      %97 = vector.broadcast %96 : vector<1x1xf32> to vector<4x128xf32>
      %98 = vector.broadcast %cst_48 : f32 to vector<4x128xf32>
      %99 = arith.select %95, %97, %98 : vector<4x128xi1>, vector<4x128xf32>
      %100 = arith.addf %93, %99 : vector<4x128xf32>
      %c0_49 = arith.constant 0 : index
      %c0_50 = arith.constant 0 : index
      %c0_51 = arith.constant 0 : index
      %c0_52 = arith.constant 0 : index
      %101 = vector.load %arg5[%c0_49, %c0_50, %c0_51, %c0_52] : memref<1x1x4x128xf32, #tpu.memory_space<vmem>>, vector<1x1x4x128xf32>
      %102 = vector.shape_cast %101 : vector<1x1x4x128xf32> to vector<4x128xf32>
      %103 = vector.shape_cast %100 : vector<4x128xf32> to vector<1x1x4x128xf32>
      tpu.vector_store %arg5[%c0_49, %c0_50, %c0_51, %c0_52], %103 {strides = array<i32>} : memref<1x1x4x128xf32, #tpu.memory_space<vmem>>, vector<1x1x4x128xf32>,
    } else {
    }
    return
  }
  func.func @transform_0(%arg0: i32, %arg1: i32, %arg2: i32) -> (i32, i32, i32, i32) {
    %c1_i32 = arith.constant 1 : i32
    %0 = arith.muli %arg1, %c1_i32 : i32
    %1 = arith.addi %0, %arg2 : i32
    %c0_i32 = arith.constant 0 : i32
    %c0_i32_0 = arith.constant 0 : i32
    %c0_i32_1 = arith.constant 0 : i32
    return %arg0, %c0_i32, %1, %c0_i32_0 : i32, i32, i32, i32
  }
  func.func @transform_1(%arg0: i32, %arg1: i32, %arg2: i32) -> (i32, i32, i32) {
    %c1_i32 = arith.constant 1 : i32
    %0 = arith.muli %arg1, %c1_i32 : i32
    %1 = arith.addi %0, %arg2 : i32
    %c0_i32 = arith.constant 0 : i32
    %c0_i32_0 = arith.constant 0 : i32
    return %arg0, %1, %c0_i32 : i32, i32, i32
  }
  func.func @transform_2(%arg0: i32, %arg1: i32, %arg2: i32) -> (i32, i32, i32, i32) {
    %c0_i32 = arith.constant 0 : i32
    %c0_i32_0 = arith.constant 0 : i32
    %c0_i32_1 = arith.constant 0 : i32
    return %arg0, %arg1, %c0_i32, %c0_i32_0 : i32, i32, i32, i32
  }
}

</mosaic_0001>

<llo_original>
// kernel: tpu_custom_call.1
$region0: #{tpu_custom_call.1}
  #allocation0 [shape = 'u32[]', space=smem, size = 0x4, offset = 0x4, fixed_abs, tag = 'smem constant byte address 0x4 - core index']
  #allocation1 [shape = 'u32[144,128]{1,0:T(1,128)}', space=vmem, size = 0x12000, scoped, tag = 'internal scratch']
  #allocation2 [shape = 'f32[4,128]{1,0:T(4,128)}', space=vmem, size = 0x800, scoped, tag = 'scratch operand']
  #allocation3 [shape = 'f32[4,128]{1,0:T(4,128)}', space=vmem, size = 0x800, scoped, tag = 'scratch operand']
  #allocation4 [shape = 'f32[1,128]{1,0:T(1,128)}', space=vmem, size = 0x200, scoped, tag = 'scratch operand']
  #allocation5 [shape = 'f32[1,128]{1,0:T(1,128)}', space=vmem, size = 0x200, scoped, tag = 'scratch operand']
  %s0 = inlined_call_operand.hbm [shape: f32[2,4,2,128], index: 0, kind: input, shape index: {}]
  %s1 = inlined_call_operand.hbm [shape: s32[2,2,128], index: 1, kind: input, shape index: {}]
  %s2 = inlined_call_operand.hbm [shape: f32[2,1,4,128], index: 2, kind: output, shape index: {}]
  %s3 = sld [smem:[#allocation0]]
  $region57: #{tpu_custom_call.1} parent=0
    _
  %s5 = ssub.s32 1, %s3
  %s6 = scalar_select 0, %s5, %s3
  $region1: #{tpu_custom_call.1} parent=0
    #allocation6 [shape = 'u8[8192]{0}', space=vmem, size = 0x2000, scoped, tag = 'input window, operand 0']
    #allocation7 [shape = 's32[2]{0}', space=sflag, size = 0x8, scoped, tag = 'scoped memory for tpu_custom_call.1']
    #allocation8 [shape = 's32[2]{0}', space=sflag, size = 0x8, scoped, tag = 'scoped memory for tpu_custom_call.1']
    #allocation9 [shape = 'u8[2048]{0}', space=vmem, size = 0x800, scoped, tag = 'input window, operand 1']
    #allocation10 [shape = 's32[2]{0}', space=sflag, size = 0x8, scoped, tag = 'scoped memory for tpu_custom_call.1']
    #allocation11 [shape = 'u8[4096]{0}', space=vmem, size = 0x1000, scoped, tag = 'output window, operand 0']
    %7 = vsyncpa [#allocation7], 0
    %s8 = scalar_lea.sflag [#allocation7], 1
    %9 = vsyncpa %s8, 0
    %10 = vsyncpa [#allocation10], 0
    %s11 = scalar_lea.sflag [#allocation10], 1
    %12 = vsyncpa %s11, 0
    %13 = vsyncpa [#allocation8], 0
    %s14 = scalar_lea.sflag [#allocation8], 1
    %15 = vsyncpa %s14, 0
    loop: start=0, step=1, limit=4
    $region2: #{tpu_custom_call.1} parent=1 // loop_pre_header
      _
    $region3: #{tpu_custom_call.1} parent=1 // loop_header
      %s17 = sphi 0, %s21
      %p18 = scmp.ge.s32.totalorder %s17, 4
      %s24 = sphi 0, %s43
      %s25 = sphi 0, %s39
      %s26 = sphi 0, %s35
      %s27 = sphi 0, %s24
      %s28 = sphi 0, %s25
      %s29 = sphi 0, %s26
      %s30 = sphi 0, %s27
      %s31 = sphi 0, %s28
      %s32 = sphi 0, %s29
      %s50 = sphi 0, %s52
      %s53 = sphi 0, %s50
      %s54 = sphi 0, %s53
      %s70 = sphi 0, %s54
      %s80 = sphi 0, %s82
      %s83 = sphi 0, %s80
      %s84 = sphi 0, %s83
      %s100 = sphi 0, %s84
      %s108 = sphi 0, %s110
      %s111 = sphi 0, %s108
      %s112 = sphi 0, %s111
      %s128 = sphi 0, %s112
    $region4: #{tpu_custom_call.1} parent=1 // loop_header_branch
      %20 = sbr.rel (%p18) target = $region8
    $region5: #{tpu_custom_call.1} parent=1 // loop_body
      %s22 = ssub.s32 %s17, 1
      %s23 = ssub.s32 %s17, 2
      %s33 = sadd.s32 1, %s26
      %p34 = scmp.ge.s32.totalorder %s33, 1
      %s35 = scalar_select %p34, 0, %s33
      %s36 = sadd.s32 1, %s25
      %s37 = scalar_select %p34, %s36, %s25
      %p38 = scmp.ge.s32.totalorder %s37, 1
      %s39 = scalar_select %p38, 0, %s37
      %s40 = sadd.s32 1, %s24
      %s41 = scalar_select %p38, %s40, %s24
      %p42 = scmp.ge.s32.totalorder %s41, 2
      %s43 = scalar_select %p42, 0, %s41
      %s44 = sadd.s32 %s25, %s26
      %s45 = sadd.s32 %s39, %s35
      %s46 = ssub.s32 %s24, %s43
      %s47 = ssub.s32 %s44, %s45
      %s48 = sor.u32 %s46, %s47
      %p49 = scmp.eq.s32.totalorder %s48, 0
      %s51 = sadd.s32 %s50, 1
      %s52 = scalar_select %p49, %s50, %s51
      %p55 = pneg %p49
      %p56 = scmp.eq.s32.totalorder %s17, 1
      %p57 = por %p55, %p56
      %p58 = scmp.ne.s32.totalorder %s50, %s53
      %p59 = scmp.eq.s32.totalorder %s17, 0
      %p60 = por %p58, %p59
      %p61 = scmp.ne.s32.totalorder %s50, %s53
      %p62 = scmp.eq.s32.totalorder %s22, 1
      %p63 = por %p61, %p62
      %p64 = scmp.ne.s32.totalorder %s53, %s54
      %p65 = scmp.eq.s32.totalorder %s22, 0
      %p66 = por %p64, %p65
      %p67 = scmp.ne.s32.totalorder %s53, %s54
      %p68 = scmp.eq.s32.totalorder %s23, 1
      %p69 = por %p67, %p68
      %p71 = scmp.ne.s32.totalorder %s54, %s70
      %p72 = scmp.eq.s32.totalorder %s23, 0
      %p73 = por %p71, %p72
      %s74 = sadd.s32 %s25, %s26
      %s75 = sadd.s32 %s39, %s35
      %s76 = ssub.s32 %s24, %s43
      %s77 = ssub.s32 %s74, %s75
      %s78 = sor.u32 %s76, %s77
      %p79 = scmp.eq.s32.totalorder %s78, 0
      %s81 = sadd.s32 %s80, 1
      %s82 = scalar_select %p79, %s80, %s81
      %p85 = pneg %p79
      %p86 = scmp.eq.s32.totalorder %s17, 1
      %p87 = por %p85, %p86
      %p88 = scmp.ne.s32.totalorder %s80, %s83
      %p89 = scmp.eq.s32.totalorder %s17, 0
      %p90 = por %p88, %p89
      %p91 = scmp.ne.s32.totalorder %s80, %s83
      %p92 = scmp.eq.s32.totalorder %s22, 1
      %p93 = por %p91, %p92
      %p94 = scmp.ne.s32.totalorder %s83, %s84
      %p95 = scmp.eq.s32.totalorder %s22, 0
      %p96 = por %p94, %p95
      %p97 = scmp.ne.s32.totalorder %s83, %s84
      %p98 = scmp.eq.s32.totalorder %s23, 1
      %p99 = por %p97, %p98
      %p101 = scmp.ne.s32.totalorder %s84, %s100
      %p102 = scmp.eq.s32.totalorder %s23, 0
      %p103 = por %p101, %p102
      %s104 = ssub.s32 %s24, %s43
      %s105 = ssub.s32 %s25, %s39
      %s106 = sor.u32 %s104, %s105
      %p107 = scmp.eq.s32.totalorder %s106, 0
      %s109 = sadd.s32 %s108, 1
      %s110 = scalar_select %p107, %s108, %s109
      %p113 = pneg %p107
      %p114 = scmp.eq.s32.totalorder %s17, 1
      %p115 = por %p113, %p114
      %p116 = scmp.ne.s32.totalorder %s108, %s111
      %p117 = scmp.eq.s32.totalorder %s17, 0
      %p118 = por %p116, %p117
      %p119 = scmp.ne.s32.totalorder %s108, %s111
      %p120 = scmp.eq.s32.totalorder %s22, 1
      %p121 = por %p119, %p120
      %p122 = scmp.ne.s32.totalorder %s111, %s112
      %p123 = scmp.eq.s32.totalorder %s22, 0
      %p124 = por %p122, %p123
      %p125 = scmp.ne.s32.totalorder %s111, %s112
      %p126 = scmp.eq.s32.totalorder %s23, 1
      %p127 = por %p125, %p126
      %p129 = scmp.ne.s32.totalorder %s112, %s128
      %p130 = scmp.eq.s32.totalorder %s23, 0
      %p131 = por %p129, %p130
      %p132 = scmp.le.s32.totalorder 1, %s17
      %p133 = scmp.lt.s32.totalorder %s17, 3
      %p134 = pnand %p132, %p133
      %p135 = pneg %p134
      // Predicated region
      $region9: #{tpu_custom_call.1} parent=5 // pred_check
        _
      $region10: #{tpu_custom_call.1} parent=5 // pred_check_branch
        %137 = sbr.rel (%p134) target = $region12
      $region11: #{tpu_custom_call.1} parent=5 // pred_region
        %s138 = ssub.s32 %s17, 1
      $region12: #{tpu_custom_call.1} parent=5 // pred_fallthru
        _
      %p139 = scmp.lt.s32.totalorder %s17, 2
      // Predicated region
      $region13: #{tpu_custom_call.1} parent=5 // pred_check
        %p140 = pneg %p139
      $region14: #{tpu_custom_call.1} parent=5 // pred_check_branch
        %142 = sbr.rel (%p140) target = $region16
      $region15: #{tpu_custom_call.1} parent=5 // pred_region
        // Predicated region
        $region17: #{tpu_custom_call.1} parent=15 // pred_check
          %p143 = pneg %p60
        $region18: #{tpu_custom_call.1} parent=15 // pred_check_branch
          %145 = sbr.rel (%p143) target = $region20
        $region19: #{tpu_custom_call.1} parent=15 // pred_region
          %s146 = sand.u32 %s50, 1
          %s147 = scalar_lea.sflag [#allocation7], %s146
          %s148 = sand.u32 %s50, 1
          %s149 = smul.addr %s148, 8
          %s150 = scalar_lea.vmem [#allocation6], %s149
          %s151 = sadd.s32 %s25, %s26
          %s153 = ssub.s32 128, 128
          %154 = vsyncadd %s147, %s153
          %s155 = smul.addr %s24, 4
          %s156 = sadd.s32 %s151, %s155
          %s157 = smul.addr %s156, 32
          %s158 = scalar_lea.hbm %s0, %s157
          %s159 = sshll.u32 %s150, 4
          %s160 = int_to_ptr.vmem [resolvable:$true] %s159
          %165 = dma.hbm_to_vmem [thread:$0]  %s158, 128, %s160, %s147, 32, 32, 2
        $region20: #{tpu_custom_call.1} parent=15 // pred_fallthru
          _
        // Predicated region
        $region21: #{tpu_custom_call.1} parent=15 // pred_check
          %p166 = pneg %p90
        $region22: #{tpu_custom_call.1} parent=15 // pred_check_branch
          %168 = sbr.rel (%p166) target = $region24
        $region23: #{tpu_custom_call.1} parent=15 // pred_region
          %s169 = sand.u32 %s80, 1
          %s170 = scalar_lea.sflag [#allocation10], %s169
          %s171 = sand.u32 %s80, 1
          %s172 = smul.addr %s171, 2
          %s173 = scalar_lea.vmem [#allocation9], %s172
          %s174 = sadd.s32 %s25, %s26
          %s176 = ssub.s32 32, 32
          %177 = vsyncadd %s170, %s176
          %s178 = sadd.s32 %s174, %s24
          %s179 = smul.addr %s178, 32
          %s180 = scalar_lea.hbm %s1, %s179
          %s182 = sshll.u32 %s173, 4
          %s183 = int_to_ptr.vmem [resolvable:$true] %s182
          %185 = dma.hbm_to_vmem [thread:$0]  %s180, 32, %s183, %s170
        $region24: #{tpu_custom_call.1} parent=15 // pred_fallthru
          _
      $region16: #{tpu_custom_call.1} parent=5 // pred_fallthru
        _
      %p186 = scmp.le.s32.totalorder 1, %s17
      %p187 = scmp.lt.s32.totalorder %s17, 3
      %p188 = pnand %p186, %p187
      %p189 = pneg %p188
      // Predicated region
      $region25: #{tpu_custom_call.1} parent=5 // pred_check
        _
      $region26: #{tpu_custom_call.1} parent=5 // pred_check_branch
        %191 = sbr.rel (%p188) target = $region28
      $region27: #{tpu_custom_call.1} parent=5 // pred_region
        %s192 = ssub.s32 %s17, 1
        %s193 = sand.u32 %s53, 1
        %s194 = scalar_lea.sflag [#allocation7], %s193
        %s195 = sand.u32 %s53, 1
        %s196 = smul.addr %s195, 8
        %s197 = scalar_lea.vmem [#allocation6], %s196
        // Predicated region
        $region29: #{tpu_custom_call.1} parent=27 // pred_check
          %p198 = pneg %p66
        $region30: #{tpu_custom_call.1} parent=27 // pred_check_branch
          %200 = sbr.rel (%p198) target = $region32
        $region31: #{tpu_custom_call.1} parent=27 // pred_region
          %201 = dma.done %s194, 128
        $region32: #{tpu_custom_call.1} parent=27 // pred_fallthru
          _
        %s202 = sand.u32 %s83, 1
        %s203 = scalar_lea.sflag [#allocation10], %s202
        %s204 = sand.u32 %s83, 1
        %s205 = smul.addr %s204, 2
        %s206 = scalar_lea.vmem [#allocation9], %s205
        // Predicated region
        $region33: #{tpu_custom_call.1} parent=27 // pred_check
          %p207 = pneg %p96
        $region34: #{tpu_custom_call.1} parent=27 // pred_check_branch
          %209 = sbr.rel (%p207) target = $region36
        $region35: #{tpu_custom_call.1} parent=27 // pred_region
          %210 = dma.done %s203, 32
        $region36: #{tpu_custom_call.1} parent=27 // pred_fallthru
          _
        %s211 = sand.u32 %s53, 1
        %s212 = scalar_lea.sflag [#allocation7], %s211
        %s213 = sand.u32 %s53, 1
        %s214 = smul.addr %s213, 8
        %s215 = scalar_lea.vmem [#allocation6], %s214
        %p216 = pneg %p66
        %p217 = pneg %p63
        %s218 = sand.u32 %s83, 1
        %s219 = scalar_lea.sflag [#allocation10], %s218
        %s220 = sand.u32 %s83, 1
        %s221 = smul.addr %s220, 2
        %s222 = scalar_lea.vmem [#allocation9], %s221
        %p223 = pneg %p96
        %p224 = pneg %p93
        %p225 = pneg %p124
        %p226 = pneg %p121
        %s227 = sand.u32 %s111, 1
        %s228 = scalar_lea.sflag [#allocation8], %s227
        %s229 = sand.u32 %s111, 1
        %s230 = smul.addr %s229, 4
        %s231 = scalar_lea.vmem [#allocation11], %s230
        %s232 = sadd.s32 %s28, %s29
        %s233 = sadd.s32 %s28, %s29
        %p234 = scmp.eq.s32.totalorder %s29, 0
        // Predicated region
        $region37: #{tpu_custom_call.1} parent=27 // pred_check
          %p235 = pneg %p234
        $region38: #{tpu_custom_call.1} parent=27 // pred_check_branch
          %237 = sbr.rel (%p235) target = $region40
        $region39: #{tpu_custom_call.1} parent=27 // pred_region
          %238 = vst [vmem:[#allocation2] sm:$0xf] 0.0
          %239 = vst [vmem:[#allocation3] sm:$0xf] 0.0
          %240 = vst [vmem:[#allocation4] sm:$0x1] 0.0
          %241 = vst [vmem:[#allocation5] sm:$0x1] 0.0
        $region40: #{tpu_custom_call.1} parent=27 // pred_fallthru
          _
        %v242 = vld [vmem:[%s197] sm:$0x3]
        %v243 = vld [vmem:[%s197 + $0x2] sm:$0x3]
        %v244 = vld [vmem:[%s197 + $0x4] sm:$0x3]
        %v245 = vld [vmem:[%s197 + $0x6] sm:$0x3]
        %v246 = vld [vmem:[%s206] sm:$0x3]
        %vm247 = vcmp.eq.s32.totalorder %v246, 0
        %vm248 = vcmp.eq.s32.totalorder %v246, 1
        %vm249 = vcmp.eq.s32.totalorder %v246, 2
        %vm250 = vcmp.eq.s32.totalorder %v246, 3
        %v251 = vsel %vm247, 1, 0
        %v252 = vsel %vm248, 1, 0
        %v253 = vsel %vm249, 1, 0
        %v254 = vsel %vm250, 1, 0
        %v255 = vcvt.s32.f32 %v251
        %v256 = vcvt.s32.f32 %v252
        %v257 = vcvt.s32.f32 %v253
        %v258 = vcvt.s32.f32 %v254
        %vm259 = vcmask 1041408
        %v260 = vsel %vm259, %v242, -inf
        %v261 = vsel %vm259, %v243, -inf
        %v262 = vsel %vm259, %v244, -inf
        %v263 = vsel %vm259, %v245, -inf
        %v264 = vmax.f32 %v260, %v261
        %v265 = vmax.f32 %v262, %v263
        %v266 = vmax.f32 %v264, %v265
        %v267 = vsub.f32 %v242, %v266
        %v268 = vsub.f32 %v243, %v266
        %v269 = vsub.f32 %v244, %v266
        %v270 = vsub.f32 %v245, %v266
        %v271 = vmul.f32 %v267, 1.442695
        %v272 = vpow.pop %v271
        %v273 = vmul.f32 %v268, 1.442695
        %v274 = vpow.pop %v273
        %v275 = vmul.f32 %v269, 1.442695
        %v276 = vpow.pop %v275
        %v277 = vmul.f32 %v270, 1.442695
        %v278 = vpow.pop %v277
        %v279 = vsel %vm259, %v272, 0.0
        %v280 = vsel %vm259, %v274, 0.0
        %v281 = vadd.f32 %v279, %v280
        %v282 = vsel %vm259, %v276, 0.0
        %v283 = vadd.f32 %v281, %v282
        %v284 = vsel %vm259, %v278, 0.0
        %v285 = vadd.f32 %v283, %v284
        %v286 = vrcp.pop %v285
        %v287 = vmul.f32 %v272, %v286
        %v288 = vmul.f32 %v274, %v286
        %v289 = vmul.f32 %v276, %v286
        %v290 = vmul.f32 %v278, %v286
        %v291 = vlog2.pop %v285
        %v292 = vmul.f32 %v291, 0.6931472
        %v293 = vadd.f32 %v266, %v292
        %v294 = vmul.f32 %v255, %v242
        %v295 = vmul.f32 %v256, %v243
        %v296 = vmul.f32 %v257, %v244
        %v297 = vmul.f32 %v258, %v245
        %v298 = vsel %vm259, %v294, 0.0
        %v299 = vsel %vm259, %v295, 0.0
        %v300 = vadd.f32 %v298, %v299
        %v301 = vsel %vm259, %v296, 0.0
        %v302 = vadd.f32 %v300, %v301
        %v303 = vsel %vm259, %v297, 0.0
        %v304 = vadd.f32 %v302, %v303
        %v305 = vsub.f32 %v293, %v304
        %v306 = vld [vmem:[#allocation4] sm:$0x1]
        %v307 = vsel %vm259, %v305, 0.0
        %v308 = vrot.slane %v307, 4
        %v309 = vadd.f32 %v307, %v308
        %v310 = vrot.slane %v309, 2
        %v311 = vadd.f32 %v309, %v310
        %v312 = vrot.slane %v311, 1
        %v313 = vadd.f32 %v311, %v312
        %v314 = vadd.f32 %v306, %v313
        %315 = vst [vmem:[#allocation4] sm:$0x1] %v314
        %v316 = vld [vmem:[#allocation5] sm:$0x1]
        %v317 = vadd.f32 %v316, 2.0
        %318 = vst [vmem:[#allocation5] sm:$0x1] %v317
        %v319 = vmul.f32 %v287, %v255
        %v320 = vmul.f32 %v288, %v256
        %v321 = vmul.f32 %v289, %v257
        %v322 = vmul.f32 %v290, %v258
        %v323 = vadd.f32 %v287, %v255
        %v324 = vadd.f32 %v288, %v256
        %v325 = vadd.f32 %v289, %v257
        %v326 = vadd.f32 %v290, %v258
        %v327 = vld [vmem:[#allocation2] sm:$0xf]
        %v328 = vsel %vm259, %v319, 0.0
        %v329 = vrot.slane %v328, 4
        %v330 = vadd.f32 %v328, %v329
        %v331 = vrot.slane %v330, 2
        %v332 = vadd.f32 %v330, %v331
        %v333 = vrot.slane %v332, 1
        %v334 = vadd.f32 %v332, %v333
        %v335 = vsel %vm259, %v320, 0.0
        %v336 = vrot.slane %v335, 4
        %v337 = vadd.f32 %v335, %v336
        %v338 = vrot.slane %v337, 2
        %v339 = vadd.f32 %v337, %v338
        %v340 = vrot.slane %v339, 1
        %v341 = vadd.f32 %v339, %v340
        %v342 = vsel %vm259, %v321, 0.0
        %v343 = vrot.slane %v342, 4
        %v344 = vadd.f32 %v342, %v343
        %v345 = vrot.slane %v344, 2
        %v346 = vadd.f32 %v344, %v345
        %v347 = vrot.slane %v346, 1
        %v348 = vadd.f32 %v346, %v347
        %v349 = vsel %vm259, %v322, 0.0
        %v350 = vrot.slane %v349, 4
        %v351 = vadd.f32 %v349, %v350
        %v352 = vrot.slane %v351, 2
        %v353 = vadd.f32 %v351, %v352
        %v354 = vrot.slane %v353, 1
        %v355 = vadd.f32 %v353, %v354
        %vm360 = vcmask 1041409
        %v361 = vsel %vm360, %v341, %v334
        %vm362 = vcmask 1042434
        %v363 = vsel %vm362, %v348, %v361
        %vm364 = vcmask 1043459
        %v365 = vsel %vm364, %v355, %v363
        %v367 = vadd.f32 %v327, %v365
        %368 = vst [vmem:[#allocation2] sm:$0xf] %v367
        %v369 = vld [vmem:[#allocation3] sm:$0xf]
        %v370 = vsel %vm259, %v323, 0.0
        %v371 = vrot.slane %v370, 4
        %v372 = vadd.f32 %v370, %v371
        %v373 = vrot.slane %v372, 2
        %v374 = vadd.f32 %v372, %v373
        %v375 = vrot.slane %v374, 1
        %v376 = vadd.f32 %v374, %v375
        %v377 = vsel %vm259, %v324, 0.0
        %v378 = vrot.slane %v377, 4
        %v379 = vadd.f32 %v377, %v378
        %v380 = vrot.slane %v379, 2
        %v381 = vadd.f32 %v379, %v380
        %v382 = vrot.slane %v381, 1
        %v383 = vadd.f32 %v381, %v382
        %v384 = vsel %vm259, %v325, 0.0
        %v385 = vrot.slane %v384, 4
        %v386 = vadd.f32 %v384, %v385
        %v387 = vrot.slane %v386, 2
        %v388 = vadd.f32 %v386, %v387
        %v389 = vrot.slane %v388, 1
        %v390 = vadd.f32 %v388, %v389
        %v391 = vsel %vm259, %v326, 0.0
        %v392 = vrot.slane %v391, 4
        %v393 = vadd.f32 %v391, %v392
        %v394 = vrot.slane %v393, 2
        %v395 = vadd.f32 %v393, %v394
        %v396 = vrot.slane %v395, 1
        %v397 = vadd.f32 %v395, %v396
        %v402 = vsel %vm360, %v383, %v376
        %v403 = vsel %vm362, %v390, %v402
        %v404 = vsel %vm364, %v397, %v403
        %v406 = vadd.f32 %v369, %v404
        %407 = vst [vmem:[#allocation3] sm:$0xf] %v406
        // Predicated region
        $region41: #{tpu_custom_call.1} parent=27 // pred_check
          %p408 = pneg %p234
        $region42: #{tpu_custom_call.1} parent=27 // pred_check_branch
          %410 = sbr.rel (%p408) target = $region44
        $region43: #{tpu_custom_call.1} parent=27 // pred_region
          %v411 = vlaneseq
          %v412 = vand.u32 %v411, 127
          %v413 = vld [vmem:[#allocation2] sm:$0xf]
          %vm414 = vcmask 1043456
          %v415 = vsel %vm414, %v413, 0.0
          %416 = vadd.xlane.f32.xlu0 %v415
          %v417 = vpop.xlane.xlu0 %416
          %v418 = vld [vmem:[#allocation3] sm:$0xf]
          %v419 = vsel %vm414, %v418, 0.0
          %420 = vadd.xlane.f32.xlu0 %v419
          %v421 = vpop.xlane.xlu0 %420
          %v422 = vld [vmem:[#allocation4] sm:$0x1]
          %vm423 = vcmask 1040384
          %v424 = vsel %vm423, %v422, 0.0
          %425 = vadd.xlane.f32.xlu0 %v424
          %v426 = vpop.xlane.xlu0 %425
          %v427 = vrot.slane %v426, 4
          %v428 = vadd.f32 %v426, %v427
          %v429 = vrot.slane %v428, 2
          %v430 = vadd.f32 %v428, %v429
          %v431 = vrot.slane %v430, 1
          %v432 = vadd.f32 %v430, %v431
          %s433 = vtos %v432
          %v434 = vld [vmem:[#allocation5] sm:$0x1]
          %v435 = vsel %vm423, %v434, 0.0
          %436 = vadd.xlane.f32.xlu0 %v435
          %v437 = vpop.xlane.xlu0 %436
          %v438 = vrot.slane %v437, 4
          %v439 = vadd.f32 %v437, %v438
          %v440 = vrot.slane %v439, 2
          %v441 = vadd.f32 %v439, %v440
          %v442 = vrot.slane %v441, 1
          %v443 = vadd.f32 %v441, %v442
          %s444 = vtos %v443
          %vm445 = vcmp.eq.s32.totalorder %v412, 0
          %v446 = vsel %vm445, %v417, 0.0
          %vm447 = vcmp.eq.s32.totalorder %v412, 1
          %v448 = vsel %vm447, %v421, 0.0
          %v449 = vadd.f32 %v446, %v448
          %vm450 = vcmp.eq.s32.totalorder %v412, 2
          %v451 = vstv %s433
          %v452 = vsel %vm450, %v451, 0.0
          %v453 = vadd.f32 %v449, %v452
          %vm454 = vcmp.eq.s32.totalorder %v412, 3
          %v455 = vstv %s444
          %v456 = vsel %vm454, %v455, 0.0
          %v457 = vadd.f32 %v453, %v456
          %vm458 = vcmp.eq.s32.totalorder %v412, 4
          %v459 = vsel %vm458, %v455, 0.0
          %v460 = vadd.f32 %v457, %v459
          %461 = vst [vmem:[%s231] sm:$0xf] %v460
        $region44: #{tpu_custom_call.1} parent=27 // pred_fallthru
          _
        %s462 = sand.u32 %s111, 1
        %s463 = scalar_lea.sflag [#allocation8], %s462
        %s464 = sand.u32 %s111, 1
        %s465 = smul.addr %s464, 4
        %s466 = scalar_lea.vmem [#allocation11], %s465
        // Predicated region
        $region45: #{tpu_custom_call.1} parent=27 // pred_check
          %p467 = pneg %p121
        $region46: #{tpu_custom_call.1} parent=27 // pred_check_branch
          %469 = sbr.rel (%p467) target = $region48
        $region47: #{tpu_custom_call.1} parent=27 // pred_region
          %s471 = ssub.s32 64, 64
          %472 = vsyncadd %s463, %s471
          %s473 = sadd.s32 %s28, %s27
          %s474 = smul.addr %s473, 64
          %s475 = scalar_lea.hbm %s2, %s474
          %s477 = sshll.u32 %s466, 4
          %s478 = int_to_ptr.vmem [resolvable:$true] %s477
          %480 = dma.vmem_to_hbm [thread:$0]  %s478, 64, %s475, %s463
        $region48: #{tpu_custom_call.1} parent=27 // pred_fallthru
          _
      $region28: #{tpu_custom_call.1} parent=5 // pred_fallthru
        _
      %p481 = scmp.le.s32.totalorder 2, %s17
      // Predicated region
      $region49: #{tpu_custom_call.1} parent=5 // pred_check
        %p482 = pneg %p481
      $region50: #{tpu_custom_call.1} parent=5 // pred_check_branch
        %484 = sbr.rel (%p482) target = $region52
      $region51: #{tpu_custom_call.1} parent=5 // pred_region
        %s485 = ssub.s32 %s17, 2
        // Predicated region
        $region53: #{tpu_custom_call.1} parent=51 // pred_check
          %p486 = pneg %p127
        $region54: #{tpu_custom_call.1} parent=51 // pred_check_branch
          %488 = sbr.rel (%p486) target = $region56
        $region55: #{tpu_custom_call.1} parent=51 // pred_region
          %s489 = sand.u32 %s112, 1
          %s490 = scalar_lea.sflag [#allocation8], %s489
          %s491 = sand.u32 %s112, 1
          %s492 = smul.addr %s491, 4
          %s493 = scalar_lea.vmem [#allocation11], %s492
          %494 = dma.done %s490, 64
        $region56: #{tpu_custom_call.1} parent=51 // pred_fallthru
          _
      $region52: #{tpu_custom_call.1} parent=5 // pred_fallthru
        _
    $region6: #{tpu_custom_call.1} parent=1 // loop_footer
      %s21 = sadd.s32 1, %s17
    $region7: #{tpu_custom_call.1} parent=1 // loop_footer_branch
      %16 = sbr.rel target = $region3
    $region8: #{tpu_custom_call.1} parent=1 // loop_exit
      _
    %495 = vsyncpa [#allocation7], 1
    %s496 = scalar_lea.sflag [#allocation7], 1
    %497 = vsyncpa %s496, 1
    %498 = vsyncpa [#allocation10], 1
    %s499 = scalar_lea.sflag [#allocation10], 1
    %500 = vsyncpa %s499, 1
    %501 = vsyncpa [#allocation8], 1
    %s502 = scalar_lea.sflag [#allocation8], 1
    %503 = vsyncpa %s502, 1

</llo_original>
